<compile_context>
chip_gen: v6e
topology: v6e:2x2x1
jax: 0.10.0
libtpu: 0.0.40
codegen_flags: <defaults>
</compile_context>

<pallas_src>
import jax
import jax.numpy as jnp
import numpy as np
from jax import lax
from jax.experimental import pallas as pl
from jax.experimental.pallas import tpu as pltpu

LANE = 128          # TPU lane width; hidden widths are zero-padded to this
H1, H2 = 16, 4      # logical GCNConv hidden widths (conv3 width is 1)


# ----------------------------------------------------------------------------
# Pallas kernel: fused gcn_norm + GCN stack + MLP head
# ----------------------------------------------------------------------------
def _gcn_fused_kernel(x_ref, adj_ref, w1_ref, w2_ref, ps_ref, gv_ref, sc_ref, o_ref):
    """gcn_norm -> conv1 -> relu -> dropout(eval: identity) -> conv2 -> relu -> conv3
       -> relu -> reshape(-1, nodes) -> linear1 -> out, all in one kernel.

    x_ref   : [N, 128]   bf16  node features, feature dim zero-padded to lane width
    adj_ref : [N, N]     f32   raw dense adjacency A[dst, src] = weight (no self loops)
    w1_ref  : [128, 128] bf16  conv1 weight (logical [F, 16]) zero-padded
    w2_ref  : [128, 128] bf16  conv2 weight (logical [16, 4]) zero-padded
    ps_ref  : [3, 128]   f32   row0 = b1, row1 = b2, row2 = w3^T (zero-padded)
    gv_ref  : [B, N]     f32   per-graph pooling matrix with (WL1 @ WO) folded in
    sc_ref  : [2]        f32   SMEM scalars: [b3, bl1 @ WO + bo]
    o_ref   : [B, 1]     f32
    """
    f32, bf = jnp.float32, jnp.bfloat16
    adj = adj_ref[...]                                   # [N, N] f32
    n = adj.shape[0]

    # --- fused PyG gcn_norm: add remaining self-loops, then D^-1/2 (A+I) D^-1/2 ---
    # (self-loop presence detected as "diagonal weight sum > 0", as in the glue before)
    rows = lax.broadcasted_iota(jnp.int32, (n, n), 0)
    cols = lax.broadcasted_iota(jnp.int32, (n, n), 1)
    is_diag = rows == cols
    diag = jnp.sum(jnp.where(is_diag, adj, 0.0), axis=-1, keepdims=True)       # [N, 1]
    adj = adj + jnp.where(jnp.logical_and(is_diag, diag <= 0.0), 1.0, 0.0)
    deg = jnp.sum(adj, axis=-1, keepdims=True)                                 # [N, 1] (XLU)
    dinv = jnp.where(deg > 0.0, lax.rsqrt(deg), 0.0)                           # [N, 1] (EUP)
    a_bf = adj.astype(bf)                                                      # bf16 MXU operand

    def prop(y):
        # Ahat @ y == dinv * ((A+I) @ (dinv * y))  -- transpose-free, f32 scaling,
        # bf16 MXU operands, f32 accumulation.
        return dinv * jnp.dot(a_bf, (dinv * y).astype(bf), preferred_element_type=f32)

    b1 = ps_ref[0:1, :]
    b2 = ps_ref[1:2, :]
    w3_row = ps_ref[2:3, :]

    # conv1: relu(Ahat @ (X @ W1) + b1)
    h = jnp.dot(x_ref[...], w1_ref[...], preferred_element_type=f32)
    h = jnp.maximum(prop(h) + b1, 0.0)
    # F.dropout(training=False) -> identity

    # conv2
    h = jnp.dot(h.astype(bf), w2_ref[...], preferred_element_type=f32)
    h = jnp.maximum(prop(h) + b2, 0.0)

    # conv3 (K=4, out=1): degenerate matmul on VPU/XLU (broadcast-mul + lane reduce);
    # only the aggregation uses the MXU.
    z = jnp.sum(h * w3_row, axis=-1, keepdims=True)                            # [N, 1] f32
    h3 = jnp.maximum(prop(z) + sc_ref[0], 0.0)

    # Head: (reshape to [B, nodes]) @ WL1 + bl1, then @ WO + bo, folded into one
    # per-graph pooling matmul (same affine map).
    o_ref[...] = jnp.dot(gv_ref[...], h3, preferred_element_type=f32) + sc_ref[1]


_VMEM_SPEC = pl.BlockSpec(memory_space=pltpu.MemorySpace.VMEM)
_SMEM_SPEC = pl.BlockSpec(memory_space=pltpu.MemorySpace.SMEM)


# ----------------------------------------------------------------------------
# Glue: raw dense adjacency (scatter only; normalization lives in the kernel)
# ----------------------------------------------------------------------------
def build_raw_adj(edge_index, edge_weight, num_nodes):
    """Dense A[dst, src] = weight (source_to_target flow), no self loops, unnormalized."""
    src = edge_index[0]
    dst = edge_index[1]
    adj = jnp.zeros((num_nodes, num_nodes), jnp.float32)
    return adj.at[dst, src].add(edge_weight.astype(jnp.float32))


def init_params(key, x_feature_num):
    ks = jax.random.split(key, 10)
    s = 0.1
    return {
        "w1": s * jax.random.normal(ks[0], (x_feature_num, H1), jnp.float32),
        "b1": s * jax.random.normal(ks[1], (1, H1), jnp.float32),
        "w2": s * jax.random.normal(ks[2], (H1, H2), jnp.float32),
        "b2": s * jax.random.normal(ks[3], (1, H2), jnp.float32),
        "w3": s * jax.random.normal(ks[4], (H2, 1), jnp.float32),
        "b3": s * jax.random.normal(ks[5], (1, 1), jnp.float32),
        "wl1": s * jax.random.normal(ks[6], (x_feature_num, 10), jnp.float32),
        "bl1": s * jax.random.normal(ks[7], (1, 10), jnp.float32),
        "wo": s * jax.random.normal(ks[8], (10, 1), jnp.float32),
        "bo": s * jax.random.normal(ks[9], (1, 1), jnp.float32),
    }


# ----------------------------------------------------------------------------
# Forward pass (Pallas)
# ----------------------------------------------------------------------------
def gcn_forward(params, x, edge_index, edge_weight, nodes_num, batch_size):
    n_total, feat = x.shape
    adj_raw = build_raw_adj(edge_index, edge_weight, n_total)

    bf = jnp.bfloat16
    # Lane-padded / bf16 operands (parameter prep, done once per call).
    x_pad = jnp.zeros((n_total, LANE), bf).at[:, :feat].set(x.astype(bf))
    w1_pad = jnp.zeros((LANE, LANE), bf).at[:feat, :H1].set(params["w1"].astype(bf))
    w2_pad = jnp.zeros((LANE, LANE), bf).at[:H1, :H2].set(params["w2"].astype(bf))
    p_small = jnp.zeros((3, LANE), jnp.float32)
    p_small = p_small.at[0, :H1].set(params["b1"][0])
    p_small = p_small.at[1, :H2].set(params["b2"][0])
    p_small = p_small.at[2, :H2].set(params["w3"][:, 0])

    # Fold linear1 ∘ out (two chained affine maps) and the [N,1]->[B,nodes] reshape into a
    # per-graph pooling matrix gv[b, b*nodes + i] = (WL1 @ WO)[i] plus a scalar constant.
    v = params["wl1"] @ params["wo"]                                          # [nodes, 1]
    c_head = (params["bl1"] @ params["wo"])[0, 0] + params["bo"][0, 0]
    gv = jnp.kron(jnp.eye(batch_size, dtype=jnp.float32), v[:, 0][None, :])   # [B, N]
    scalars = jnp.stack([params["b3"][0, 0], c_head]).astype(jnp.float32)     # SMEM

    n, b = int(n_total), int(batch_size)
    cost = pl.CostEstimate(
        flops=2 * n * feat * H1 + 2 * n * H1 * H2 + 2 * n * H2
        + 2 * n * n * (H1 + H2 + 1) + 2 * b * n + 4 * n * n,
        transcendentals=n,
        bytes_accessed=2 * (n * LANE + 2 * LANE * LANE)
        + 4 * (n * n + 3 * LANE + b * n + 2 + b),
    )

    return pl.pallas_call(
        _gcn_fused_kernel,
        out_shape=jax.ShapeDtypeStruct((batch_size, 1), jnp.float32),
        in_specs=[_VMEM_SPEC] * 6 + [_SMEM_SPEC],
        out_specs=_VMEM_SPEC,
        cost_estimate=cost,
    )(x_pad, adj_raw, w1_pad, w2_pad, p_small, gv, scalars)


# ----------------------------------------------------------------------------
# Pure-JAX references for correctness checks
# ----------------------------------------------------------------------------
def _add_remaining_self_loops_dense(adj):
    diag = jnp.diagonal(adj)
    return adj + jnp.diag(jnp.where(diag > 0.0, 0.0, 1.0))


def _ref_bf16_matched(params, x, adj_raw, nodes_num, batch_size):
    """Mirrors the kernel's dtype / normalization strategy exactly."""
    bf = jnp.bfloat16
    adj = _add_remaining_self_loops_dense(adj_raw)
    deg = adj.sum(axis=-1, keepdims=True)
    dinv = jnp.where(deg > 0.0, lax.rsqrt(deg), 0.0)
    a_bf = adj.astype(bf)

    def prop(y):
        return dinv * jnp.dot(a_bf, (dinv * y).astype(bf), preferred_element_type=jnp.float32)

    h = jnp.dot(x.astype(bf), params["w1"].astype(bf), preferred_element_type=jnp.float32)
    h = jnp.maximum(prop(h) + params["b1"], 0.0)
    h = jnp.dot(h.astype(bf), params["w2"].astype(bf), preferred_element_type=jnp.float32)
    h = jnp.maximum(prop(h) + params["b2"], 0.0)
    z = h @ params["w3"]
    h3 = jnp.maximum(prop(z) + params["b3"], 0.0)
    h3 = h3.reshape(batch_size, nodes_num)
    y = h3 @ params["wl1"] + params["bl1"]
    return y @ params["wo"] + params["bo"]


def _ref_f32(params, x, adj_raw, nodes_num, batch_size):
    """Original full-f32 semantics (parity sanity check; bf16 adjacency adds ~1% error)."""
    adj = _add_remaining_self_loops_dense(adj_raw)
    deg = adj.sum(axis=1)
    dinv = jnp.where(deg > 0, 1.0 / jnp.sqrt(deg), 0.0)
    a_hat = dinv[:, None] * adj * dinv[None, :]
    h = jnp.maximum(a_hat @ (x @ params["w1"]) + params["b1"], 0.0)
    h = jnp.maximum(a_hat @ (h @ params["w2"]) + params["b2"], 0.0)
    h = jnp.maximum(a_hat @ (h @ params["w3"]) + params["b3"], 0.0)
    h = h.reshape(batch_size, nodes_num)
    h = h @ params["wl1"] + params["bl1"]
    return h @ params["wo"] + params["bo"]


# ----------------------------------------------------------------------------
if __name__ == "__main__":
    batch_size = 2
    x_feature_num = 8            # == nodes_num per graph (as in the module)
    nodes_num = x_feature_num
    n_total = batch_size * nodes_num
    edges_per_graph = 12

    key = jax.random.PRNGKey(0)
    k_x, k_e, k_w, k_p = jax.random.split(key, 4)

    # node features: [batch * nodes, features]
    x = jax.random.normal(k_x, (n_total, x_feature_num), jnp.float32)

    # block-diagonal batched graph: random edges within each graph, offset per graph
    e = jax.random.randint(k_e, (2, edges_per_graph), 0, nodes_num)
    edge_index = jnp.concatenate(
        [e + g * nodes_num for g in range(batch_size)], axis=1
    ).astype(jnp.int32)                                           # [2, E]
    edge_weight = jax.random.uniform(
        k_w, (edge_index.shape[1],), jnp.float32, 0.5, 1.5)

    params = init_params(k_p, x_feature_num)

    out = gcn_forward(params, x, edge_index, edge_weight, nodes_num, batch_size)
    out = jax.block_until_ready(out)

    adj_raw = build_raw_adj(edge_index, edge_weight, n_total)
    ref_m = _ref_bf16_matched(params, x, adj_raw, nodes_num, batch_size)
    ref_f = _ref_f32(params, x, adj_raw, nodes_num, batch_size)

    # Tight check against the dtype-matched reference (verifies the kernel itself).
    np.testing.assert_allclose(np.asarray(out), np.asarray(ref_m), rtol=1e-4, atol=1e-5)
    # Loose parity check against the original f32 math (bf16 adjacency/X adds ~1% error).
    np.testing.assert_allclose(np.asarray(out), np.asarray(ref_f), rtol=1e-1, atol=5e-2)

    print("KERNEL_OK")
</pallas_src>

<mosaic_0001>
module attributes {stable_mosaic.version = 11 : i64} {
  func.func @_gcn_fused_kernel(%arg0: memref<16x128xbf16, #tpu.memory_space<vmem>>, %arg1: memref<16x16xf32, #tpu.memory_space<vmem>>, %arg2: memref<128x128xbf16, #tpu.memory_space<vmem>>, %arg3: memref<128x128xbf16, #tpu.memory_space<vmem>>, %arg4: memref<3x128xf32, #tpu.memory_space<vmem>>, %arg5: memref<2x16xf32, #tpu.memory_space<vmem>>, %arg6: memref<2xf32, #tpu.memory_space<smem>>, %arg7: memref<2x1xf32, #tpu.memory_space<vmem>>) attributes {dimension_semantics = [], scalar_prefetch = 0 : i64, scratch_operands = 0 : i64, tpu.core_type = #tpu.core_type<tc>} {
    %c0 = arith.constant 0 : index
    %c0_0 = arith.constant 0 : index
    %0 = vector.load %arg1[%c0, %c0_0] : memref<16x16xf32, #tpu.memory_space<vmem>>, vector<16x16xf32>
    %1 = tpu.iota {dimensions = array<i32: 0>} : vector<16x16xi32>
    %2 = tpu.iota {dimensions = array<i32: 1>} : vector<16x16xi32>
    %3 = arith.cmpi eq, %1, %2 : vector<16x16xi32>
    %cst = arith.constant 0.000000e+00 : f32
    %4 = vector.broadcast %cst : f32 to vector<16x16xf32>
    %5 = arith.select %3, %0, %4 : vector<16x16xi1>, vector<16x16xf32>
    %cst_1 = arith.constant dense<0.000000e+00> : vector<16xf32>
    %6 = vector.multi_reduction <add>, %5, %cst_1 [1] : vector<16x16xf32> to vector<16xf32>
    %7 = vector.shape_cast %6 : vector<16xf32> to vector<16x1xf32>
    %cst_2 = arith.constant 0.000000e+00 : f32
    %8 = vector.broadcast %cst_2 : f32 to vector<16x1xf32>
    %9 = arith.cmpf ole, %7, %8 : vector<16x1xf32>
    %10 = vector.broadcast %9 : vector<16x1xi1> to vector<16x16xi1>
    %11 = arith.andi %3, %10 : vector<16x16xi1>
    %cst_3 = arith.constant 1.000000e+00 : f32
    %cst_4 = arith.constant 0.000000e+00 : f32
    %12 = vector.broadcast %cst_3 : f32 to vector<16x16xf32>
    %13 = vector.broadcast %cst_4 : f32 to vector<16x16xf32>
    %14 = arith.select %11, %12, %13 : vector<16x16xi1>, vector<16x16xf32>
    %15 = arith.addf %0, %14 : vector<16x16xf32>
    %cst_5 = arith.constant dense<0.000000e+00> : vector<16xf32>
    %16 = vector.multi_reduction <add>, %15, %cst_5 [1] : vector<16x16xf32> to vector<16xf32>
    %17 = vector.shape_cast %16 : vector<16xf32> to vector<16x1xf32>
    %cst_6 = arith.constant 0.000000e+00 : f32
    %18 = vector.broadcast %cst_6 : f32 to vector<16x1xf32>
    %19 = arith.cmpf ogt, %17, %18 : vector<16x1xf32>
    %20 = math.rsqrt %17 : vector<16x1xf32>
    %cst_7 = arith.constant 0.000000e+00 : f32
    %21 = vector.broadcast %cst_7 : f32 to vector<16x1xf32>
    %22 = arith.select %19, %20, %21 : vector<16x1xi1>, vector<16x1xf32>
    %23 = arith.truncf %15 : vector<16x16xf32> to vector<16x16xbf16>
    %c0_8 = arith.constant 0 : index
    %c0_9 = arith.constant 0 : index
    %24 = vector.load %arg4[%c0_8, %c0_9] : memref<3x128xf32, #tpu.memory_space<vmem>>, vector<1x128xf32>
    %c1 = arith.constant 1 : index
    %c0_10 = arith.constant 0 : index
    %25 = vector.load %arg4[%c1, %c0_10] : memref<3x128xf32, #tpu.memory_space<vmem>>, vector<1x128xf32>
    %c2 = arith.constant 2 : index
    %c0_11 = arith.constant 0 : index
    %26 = vector.load %arg4[%c2, %c0_11] : memref<3x128xf32, #tpu.memory_space<vmem>>, vector<1x128xf32>
    %c0_12 = arith.constant 0 : index
    %c0_13 = arith.constant 0 : index
    %27 = vector.load %arg0[%c0_12, %c0_13] : memref<16x128xbf16, #tpu.memory_space<vmem>>, vector<16x128xbf16>
    %c0_14 = arith.constant 0 : index
    %c0_15 = arith.constant 0 : index
    %28 = vector.load %arg2[%c0_14, %c0_15] : memref<128x128xbf16, #tpu.memory_space<vmem>>, vector<128x128xbf16>
    %cst_16 = arith.constant dense<0.000000e+00> : vector<16x128xf32>
    %29 = tpu.matmul %27, %28, %cst_16 {dimension_numbers = #tpu.dot_dimension_numbers<[1], [0], [0], [1], [0, 0, 1, 1], [], []>} : vector<16x128xbf16>, vector<128x128xbf16>, vector<16x128xf32> -> vector<16x128xf32>
    %30 = vector.broadcast %22 : vector<16x1xf32> to vector<16x128xf32>
    %31 = arith.mulf %30, %29 : vector<16x128xf32>
    %32 = arith.truncf %31 : vector<16x128xf32> to vector<16x128xbf16>
    %cst_17 = arith.constant dense<0.000000e+00> : vector<16x128xf32>
    %33 = tpu.matmul %23, %32, %cst_17 {dimension_numbers = #tpu.dot_dimension_numbers<[1], [0], [0], [1], [0, 0, 1, 1], [], []>} : vector<16x16xbf16>, vector<16x128xbf16>, vector<16x128xf32> -> vector<16x128xf32>
    %34 = vector.broadcast %22 : vector<16x1xf32> to vector<16x128xf32>
    %35 = arith.mulf %34, %33 : vector<16x128xf32>
    %36 = vector.broadcast %24 : vector<1x128xf32> to vector<16x128xf32>
    %37 = arith.addf %35, %36 : vector<16x128xf32>
    %cst_18 = arith.constant 0.000000e+00 : f32
    %38 = vector.broadcast %cst_18 : f32 to vector<16x128xf32>
    %39 = arith.maximumf %37, %38 : vector<16x128xf32>
    %40 = arith.truncf %39 : vector<16x128xf32> to vector<16x128xbf16>
    %c0_19 = arith.constant 0 : index
    %c0_20 = arith.constant 0 : index
    %41 = vector.load %arg3[%c0_19, %c0_20] : memref<128x128xbf16, #tpu.memory_space<vmem>>, vector<128x128xbf16>
    %cst_21 = arith.constant dense<0.000000e+00> : vector<16x128xf32>
    %42 = tpu.matmul %40, %41, %cst_21 {dimension_numbers = #tpu.dot_dimension_numbers<[1], [0], [0], [1], [0, 0, 1, 1], [], []>} : vector<16x128xbf16>, vector<128x128xbf16>, vector<16x128xf32> -> vector<16x128xf32>
    %43 = vector.broadcast %22 : vector<16x1xf32> to vector<16x128xf32>
    %44 = arith.mulf %43, %42 : vector<16x128xf32>
    %45 = arith.truncf %44 : vector<16x128xf32> to vector<16x128xbf16>
    %cst_22 = arith.constant dense<0.000000e+00> : vector<16x128xf32>
    %46 = tpu.matmul %23, %45, %cst_22 {dimension_numbers = #tpu.dot_dimension_numbers<[1], [0], [0], [1], [0, 0, 1, 1], [], []>} : vector<16x16xbf16>, vector<16x128xbf16>, vector<16x128xf32> -> vector<16x128xf32>
    %47 = vector.broadcast %22 : vector<16x1xf32> to vector<16x128xf32>
    %48 = arith.mulf %47, %46 : vector<16x128xf32>
    %49 = vector.broadcast %25 : vector<1x128xf32> to vector<16x128xf32>
    %50 = arith.addf %48, %49 : vector<16x128xf32>
    %cst_23 = arith.constant 0.000000e+00 : f32
    %51 = vector.broadcast %cst_23 : f32 to vector<16x128xf32>
    %52 = arith.maximumf %50, %51 : vector<16x128xf32>
    %53 = vector.broadcast %26 : vector<1x128xf32> to vector<16x128xf32>
    %54 = arith.mulf %52, %53 : vector<16x128xf32>
    %cst_24 = arith.constant dense<0.000000e+00> : vector<16xf32>
    %55 = vector.multi_reduction <add>, %54, %cst_24 [1] : vector<16x128xf32> to vector<16xf32>
    %56 = vector.shape_cast %55 : vector<16xf32> to vector<16x1xf32>
    %57 = arith.mulf %22, %56 : vector<16x1xf32>
    %58 = arith.truncf %57 : vector<16x1xf32> to vector<16x1xbf16>
    %cst_25 = arith.constant dense<0.000000e+00> : vector<16x1xf32>
    %59 = tpu.matmul %23, %58, %cst_25 {dimension_numbers = #tpu.dot_dimension_numbers<[1], [0], [0], [1], [0, 0, 1, 1], [], []>} : vector<16x16xbf16>, vector<16x1xbf16>, vector<16x1xf32> -> vector<16x1xf32>
    %60 = arith.mulf %22, %59 : vector<16x1xf32>
    %c0_26 = arith.constant 0 : index
    %61 = memref.load %arg6[%c0_26] : memref<2xf32, #tpu.memory_space<smem>>
    %62 = vector.broadcast %61 : f32 to vector<16x1xf32>
    %63 = arith.addf %60, %62 : vector<16x1xf32>
    %cst_27 = arith.constant 0.000000e+00 : f32
    %64 = vector.broadcast %cst_27 : f32 to vector<16x1xf32>
    %65 = arith.maximumf %63, %64 : vector<16x1xf32>
    %c0_28 = arith.constant 0 : index
    %c0_29 = arith.constant 0 : index
    %66 = vector.load %arg5[%c0_28, %c0_29] : memref<2x16xf32, #tpu.memory_space<vmem>>, vector<2x16xf32>
    %cst_30 = arith.constant dense<0.000000e+00> : vector<2x1xf32>
    %67 = tpu.matmul %66, %65, %cst_30 {dimension_numbers = #tpu.dot_dimension_numbers<[1], [0], [0], [1], [0, 0, 1, 1], [], []>} : vector<2x16xf32>, vector<16x1xf32>, vector<2x1xf32> -> vector<2x1xf32>
    %c1_31 = arith.constant 1 : index
    %68 = memref.load %arg6[%c1_31] : memref<2xf32, #tpu.memory_space<smem>>
    %69 = vector.broadcast %68 : f32 to vector<2x1xf32>
    %70 = arith.addf %67, %69 : vector<2x1xf32>
    %c0_32 = arith.constant 0 : index
    %c0_33 = arith.constant 0 : index
    %71 = vector.load %arg7[%c0_32, %c0_33] : memref<2x1xf32, #tpu.memory_space<vmem>>, vector<2x1xf32>
    tpu.vector_store %arg7[%c0_32, %c0_33], %70 {strides = array<i32>} : memref<2x1xf32, #tpu.memory_space<vmem>>, vector<2x1xf32>,
    return
  }
}

</mosaic_0001>

<llo_original>
// kernel: tpu_custom_call.1
$region0: #{tpu_custom_call.1}
  #allocation0 [shape = 'u32[]', space=smem, size = 0x4, offset = 0x4, fixed_abs, tag = 'smem constant byte address 0x4 - core index']
  #allocation1 [shape = 'u32[144,128]{1,0:T(1,128)}', space=vmem, size = 0x12000, scoped, tag = 'internal scratch']
  %s0 = inlined_call_operand.hbm [shape: bf16[16,128], index: 0, kind: input, shape index: {}]
  %s1 = inlined_call_operand.hbm [shape: f32[16,16], index: 1, kind: input, shape index: {}]
  %s2 = inlined_call_operand.hbm [shape: bf16[128,128], index: 2, kind: input, shape index: {}]
  %s3 = inlined_call_operand.hbm [shape: bf16[128,128], index: 3, kind: input, shape index: {}]
  %s4 = inlined_call_operand.vmem [shape: f32[3,128], index: 4, kind: input, shape index: {}]
  %s5 = inlined_call_operand.vmem [shape: f32[2,16], index: 5, kind: input, shape index: {}]
  %s6 = inlined_call_operand.vmem [shape: f32[2], index: 6, kind: input, shape index: {}]
  %s7 = inlined_call_operand.vmem [shape: f32[2,1], index: 7, kind: output, shape index: {}]
  %s8 = sld [smem:[#allocation0]]
  $region58: #{tpu_custom_call.1} parent=0
    _
  %s10 = ssub.s32 1, %s8
  %s11 = scalar_select 0, %s10, %s8
  $region1: #{tpu_custom_call.1} parent=0
    #allocation2 [shape = 'u8[4096]{0}', space=vmem, size = 0x1000, scoped, tag = 'input window, operand 0, single buffered']
    #allocation3 [shape = 's32[1]{0}', space=sflag, size = 0x4, scoped, tag = 'scoped memory for tpu_custom_call.1']
    #allocation4 [shape = 's32[1]{0}', space=sflag, size = 0x4, scoped, tag = 'scoped memory for tpu_custom_call.1']
    #allocation5 [shape = 'u8[8192]{0}', space=vmem, size = 0x2000, scoped, tag = 'input window, operand 1, single buffered']
    #allocation6 [shape = 's32[1]{0}', space=sflag, size = 0x4, scoped, tag = 'scoped memory for tpu_custom_call.1']
    #allocation7 [shape = 'u8[32768]{0}', space=vmem, size = 0x8000, scoped, tag = 'input window, operand 2, single buffered']
    #allocation8 [shape = 'u8[32768]{0}', space=vmem, size = 0x8000, scoped, tag = 'input window, operand 3, single buffered']
    #allocation9 [shape = 's32[1]{0}', space=sflag, size = 0x4, scoped, tag = 'scoped memory for tpu_custom_call.1']
    #allocation10 [shape = 'u8[512]{0}', space=smem, size = 0x200, scoped, tag = 'input window, operand 6, single buffered']
    %12 = vsyncpa [#allocation3], 0
    %13 = vsyncpa [#allocation6], 0
    %14 = vsyncpa [#allocation9], 0
    %15 = vsyncpa [#allocation4], 0
    // Predicated region
    $region2: #{tpu_custom_call.1} parent=1 // pred_check
      _
    $region3: #{tpu_custom_call.1} parent=1 // pred_check_branch
      %17 = sbr.rel (0) target = $region5
    $region4: #{tpu_custom_call.1} parent=1 // pred_region
      %s19 = ssub.s32 128, 128
      %20 = vsyncadd [#allocation3], %s19
      %s21 = sshll.u32 [#allocation2], 4
      %s22 = int_to_ptr.vmem [resolvable:$true] %s21
      %27 = dma.hbm_to_vmem [thread:$0]  %s0, 128, %s22, [#allocation3], 64, 64, 4
    $region5: #{tpu_custom_call.1} parent=1 // pred_fallthru
      _
    // Predicated region
    $region6: #{tpu_custom_call.1} parent=1 // pred_check
      _
    $region7: #{tpu_custom_call.1} parent=1 // pred_check_branch
      %29 = sbr.rel (0) target = $region9
    $region8: #{tpu_custom_call.1} parent=1 // pred_region
      %s31 = ssub.s32 256, 256
      %32 = vsyncadd [#allocation6], %s31
      %s33 = sshll.u32 [#allocation5], 4
      %s34 = int_to_ptr.vmem [resolvable:$true] %s33
      %39 = dma.hbm_to_vmem [thread:$0]  %s1, 256, %s34, [#allocation6], 128, 128, 8
    $region9: #{tpu_custom_call.1} parent=1 // pred_fallthru
      _
    // Predicated region
    $region10: #{tpu_custom_call.1} parent=1 // pred_check
      _
    $region11: #{tpu_custom_call.1} parent=1 // pred_check_branch
      %41 = sbr.rel (0) target = $region13
    $region12: #{tpu_custom_call.1} parent=1 // pred_region
      %s43 = ssub.s32 1024, 1024
      %44 = vsyncadd [#allocation6], %s43
      %s45 = sshll.u32 [#allocation7], 4
      %s46 = int_to_ptr.vmem [resolvable:$true] %s45
      %51 = dma.hbm_to_vmem [thread:$0]  %s2, 1024, %s46, [#allocation6], 64, 64, 4
    $region13: #{tpu_custom_call.1} parent=1 // pred_fallthru
      _
    // Predicated region
    $region14: #{tpu_custom_call.1} parent=1 // pred_check
      _
    $region15: #{tpu_custom_call.1} parent=1 // pred_check_branch
      %53 = sbr.rel (0) target = $region17
    $region16: #{tpu_custom_call.1} parent=1 // pred_region
      %s55 = ssub.s32 1024, 1024
      %56 = vsyncadd [#allocation9], %s55
      %s57 = sshll.u32 [#allocation8], 4
      %s58 = int_to_ptr.vmem [resolvable:$true] %s57
      %63 = dma.hbm_to_vmem [thread:$0]  %s3, 1024, %s58, [#allocation9], 64, 64, 4
    $region17: #{tpu_custom_call.1} parent=1 // pred_fallthru
      _
    // Predicated region
    $region18: #{tpu_custom_call.1} parent=1 // pred_check
      _
    $region19: #{tpu_custom_call.1} parent=1 // pred_check_branch
      %65 = sbr.rel (0) target = $region21
    $region20: #{tpu_custom_call.1} parent=1 // pred_region
      _
    $region21: #{tpu_custom_call.1} parent=1 // pred_fallthru
      _
    // Predicated region
    $region22: #{tpu_custom_call.1} parent=1 // pred_check
      _
    $region23: #{tpu_custom_call.1} parent=1 // pred_check_branch
      %67 = sbr.rel (0) target = $region25
    $region24: #{tpu_custom_call.1} parent=1 // pred_region
      _
    $region25: #{tpu_custom_call.1} parent=1 // pred_fallthru
      _
    // Predicated region
    $region26: #{tpu_custom_call.1} parent=1 // pred_check
      _
    $region27: #{tpu_custom_call.1} parent=1 // pred_check_branch
      %69 = sbr.rel (0) target = $region29
    $region28: #{tpu_custom_call.1} parent=1 // pred_region
      %s71 = ssub.s32 16, 16
      %72 = vsyncadd [#allocation4], %s71
      %s74 = sshll.u32 %s6, 4
      %s75 = int_to_ptr.vmem [resolvable:$true] %s74
      %77 = dma.vmem_to_smem %s75, 16, [#allocation10], [#allocation4]
    $region29: #{tpu_custom_call.1} parent=1 // pred_fallthru
      _
    // Predicated region
    $region30: #{tpu_custom_call.1} parent=1 // pred_check
      _
    $region31: #{tpu_custom_call.1} parent=1 // pred_check_branch
      %79 = sbr.rel (0) target = $region33
    $region32: #{tpu_custom_call.1} parent=1 // pred_region
      %80 = dma.done [#allocation3], 128
    $region33: #{tpu_custom_call.1} parent=1 // pred_fallthru
      _
    // Predicated region
    $region34: #{tpu_custom_call.1} parent=1 // pred_check
      _
    $region35: #{tpu_custom_call.1} parent=1 // pred_check_branch
      %82 = sbr.rel (0) target = $region37
    $region36: #{tpu_custom_call.1} parent=1 // pred_region
      %83 = dma.done [#allocation6], 256
    $region37: #{tpu_custom_call.1} parent=1 // pred_fallthru
      _
    // Predicated region
    $region38: #{tpu_custom_call.1} parent=1 // pred_check
      _
    $region39: #{tpu_custom_call.1} parent=1 // pred_check_branch
      %85 = sbr.rel (0) target = $region41
    $region40: #{tpu_custom_call.1} parent=1 // pred_region
      %86 = dma.done [#allocation6], 1024
    $region41: #{tpu_custom_call.1} parent=1 // pred_fallthru
      _
    // Predicated region
    $region42: #{tpu_custom_call.1} parent=1 // pred_check
      _
    $region43: #{tpu_custom_call.1} parent=1 // pred_check_branch
      %88 = sbr.rel (0) target = $region45
    $region44: #{tpu_custom_call.1} parent=1 // pred_region
      %89 = dma.done [#allocation9], 1024
    $region45: #{tpu_custom_call.1} parent=1 // pred_fallthru
      _
    // Predicated region
    $region46: #{tpu_custom_call.1} parent=1 // pred_check
      _
    $region47: #{tpu_custom_call.1} parent=1 // pred_check_branch
      %91 = sbr.rel (0) target = $region49
    $region48: #{tpu_custom_call.1} parent=1 // pred_region
      %92 = dma.done [#allocation4], 16
    $region49: #{tpu_custom_call.1} parent=1 // pred_fallthru
      _
    %93 = sfence
    %v95 = vld [vmem:[#allocation5] sm:$0xff]
    %v96 = vld [vmem:[#allocation5 + $0x8] sm:$0xff]
    %v97 = vlaneseq
    %v98 = vshrl.u32 %v97, 7
    %v99 = vadd.s32 %v98, 8
    %v100 = vlaneseq
    %v101 = vand.u32 %v100, 127
    %vm102 = vcmp.eq.s32.totalorder %v98, %v101
    %vm103 = vcmp.eq.s32.totalorder %v99, %v101
    %v104 = vsel %vm102, %v95, 0.0
    %v105 = vsel %vm103, %v96, 0.0
    %vm106 = vcmask 130048
    %v107 = vsel %vm106, %v104, 0.0
    %108 = vadd.xlane.f32.xlu0 %v107
    %v109 = vpop.xlane.xlu0 %108
    %v110 = vsel %vm106, %v105, 0.0
    %111 = vadd.xlane.f32.xlu0 %v110
    %v112 = vpop.xlane.xlu0 %111
    %vm113 = vcmp.le.f32.partialorder %v109, 0.0
    %vm114 = vcmp.le.f32.partialorder %v112, 0.0
    %v115 = vsel %vm113, 1, 0
    %v116 = vsel %vm114, 1, 0
    %vm117 = vcmp.eq.s32.totalorder %v115, 1
    %vm118 = vcmp.eq.s32.totalorder %v116, 1
    %vm119 = vmand %vm102, %vm117
    %vm120 = vmand %vm103, %vm118
    %v121 = vsel %vm119, 1.0, 0.0
    %v122 = vsel %vm120, 1.0, 0.0
    %v123 = vadd.f32 %v95, %v121
    %v124 = vadd.f32 %v96, %v122
    %v125 = vsel %vm106, %v123, 0.0
    %126 = vadd.xlane.f32.xlu0 %v125
    %v127 = vpop.xlane.xlu0 %126
    %v128 = vsel %vm106, %v124, 0.0
    %129 = vadd.xlane.f32.xlu0 %v128
    %v130 = vpop.xlane.xlu0 %129
    %vm131 = vcmp.gt.f32.partialorder %v127, 0.0
    %vm132 = vcmp.gt.f32.partialorder %v130, 0.0
    %v133 = vrsqrt.pop %v127
    %v134 = vrsqrt.pop %v130
    %v135 = vsel %vm131, %v133, 0.0
    %v136 = vsel %vm132, %v134, 0.0
    %v137 = vpack.c.bf16 %v124, %v123
    %v138 = vld [vmem:[%s4] sm:$0x1]
    %v139 = vld [vmem:[%s4 + $0x1] sm:$0x1]
    %v140 = vld [vmem:[%s4 + $0x2] sm:$0x1]
    %v141 = vld [vmem:[#allocation2] sm:$0xf]
    %v142 = vld [vmem:[#allocation2 + $0x4] sm:$0xf]
    %v143 = vld [vmem:[#allocation7] sm:$0xf]
    %v144 = vld [vmem:[#allocation7 + $0x4] sm:$0xf]
    %v145 = vld [vmem:[#allocation7 + $0x8] sm:$0xf]
    %v146 = vld [vmem:[#allocation7 + $0xc] sm:$0xf]
    %v147 = vld [vmem:[#allocation7 + $0x10] sm:$0xf]
    %v148 = vld [vmem:[#allocation7 + $0x14] sm:$0xf]
    %v149 = vld [vmem:[#allocation7 + $0x18] sm:$0xf]
    %v150 = vld [vmem:[#allocation7 + $0x1c] sm:$0xf]
    %v151 = vld [vmem:[#allocation7 + $0x20] sm:$0xf]
    %v152 = vld [vmem:[#allocation7 + $0x24] sm:$0xf]
    %v153 = vld [vmem:[#allocation7 + $0x28] sm:$0xf]
    %v154 = vld [vmem:[#allocation7 + $0x2c] sm:$0xf]
    %v155 = vld [vmem:[#allocation7 + $0x30] sm:$0xf]
    %v156 = vld [vmem:[#allocation7 + $0x34] sm:$0xf]
    %v157 = vld [vmem:[#allocation7 + $0x38] sm:$0xf]
    %v158 = vld [vmem:[#allocation7 + $0x3c] sm:$0xf]
    %v161 = vunpack.c.l.b16 %v141
    %v162 = vunpack.c.l.b16 %v142
    %v163 = vpack.c.b16 %v162, %v161
    %v181 = vunpack.c.l.b16 %v143
    %v182 = vunpack.c.l.b16 %v144
    %v183 = vunpack.c.l.b16 %v145
    %v184 = vunpack.c.l.b16 %v146
    %v185 = vunpack.c.l.b16 %v147
    %v186 = vunpack.c.l.b16 %v148
    %v187 = vunpack.c.l.b16 %v149
    %v188 = vunpack.c.l.b16 %v150
    %v189 = vunpack.c.l.b16 %v151
    %v190 = vunpack.c.l.b16 %v152
    %v191 = vunpack.c.l.b16 %v153
    %v192 = vunpack.c.l.b16 %v154
    %v193 = vunpack.c.l.b16 %v155
    %v194 = vunpack.c.l.b16 %v156
    %v195 = vunpack.c.l.b16 %v157
    %v196 = vunpack.c.l.b16 %v158
    %v197 = vpack.c.b16 %v182, %v181
    %v198 = vpack.c.b16 %v184, %v183
    %v199 = vpack.c.b16 %v186, %v185
    %v200 = vpack.c.b16 %v188, %v187
    %v201 = vpack.c.b16 %v190, %v189
    %v202 = vpack.c.b16 %v192, %v191
    %v203 = vpack.c.b16 %v194, %v193
    %v204 = vpack.c.b16 %v196, %v195
    %213 = vmatprep.subr.bf16.mxu0 0
    %214 = vmatpush1.bf16.msra.mxu0 %v204
    %215 = vmatprep.subr.bf16.mxu0 0
    %216 = vmatpush1.bf16.msra.mxu0 %v203
    %217 = vmatprep.subr.bf16.mxu0 0
    %218 = vmatpush1.bf16.msra.mxu0 %v202
    %219 = vmatprep.subr.bf16.mxu0 0
    %220 = vmatpush1.bf16.msra.mxu0 %v201
    %221 = vmatprep.subr.bf16.mxu0 0
    %222 = vmatpush1.bf16.msra.mxu0 %v200
    %223 = vmatprep.subr.bf16.mxu0 0
    %224 = vmatpush1.bf16.msra.mxu0 %v199
    %225 = vmatprep.subr.bf16.mxu0 0
    %226 = vmatpush1.bf16.msra.mxu0 %v198
    %227 = vmatprep.subr.bf16.mxu0 0
    %228 = vmatpush1.bf16.msra.mxu0 %v197
    %229 = vmatprep.subr.bf16.mxu0 0
    %230 = vmatpush2.bf16.msra.mxu0 0
    %231 = vmatprep.subr.bf16.mxu0 0
    %232 = vmatpush2.bf16.msra.mxu0 0
    %233 = vmatprep.subr.bf16.mxu0 0
    %234 = vmatpush2.bf16.msra.mxu0 0
    %235 = vmatprep.subr.bf16.mxu0 0
    %236 = vmatpush2.bf16.msra.mxu0 0
    %237 = vmatprep.subr.bf16.mxu0 0
    %238 = vmatpush2.bf16.msra.mxu0 0
    %239 = vmatprep.subr.bf16.mxu0 0
    %240 = vmatpush2.bf16.msra.mxu0 0
    %241 = vmatprep.subr.bf16.mxu0 0
    %242 = vmatpush2.bf16.msra.mxu0 0
    %243 = vmatprep.subr.bf16.mxu0 0
    %244 = vmatpush2.bf16.msra.mxu0 0
    %245 = vmatprep.mubr.bf16.mxu0 0
    %246 = vmatmul.mubr.bf16.gmra.mxu0 %v163
    %v247 = vpop.f32.mrf.mxu0
    %v248 = vadd.f32 0.0, %v247
    %v249 = vpop.f32.mrf.mxu0
    %v250 = vpop.f32.mrf.mxu0
    %v251 = vadd.f32 0.0, %v250
    %v252 = vpop.f32.mrf.mxu0
    %253 = vdwg.mxu0
    %v254 = vmul.f32 %v135, %v248
    %v255 = vmul.f32 %v136, %v251
    %v256 = vpack.c.bf16 %v255, %v254
    %v258 = vsel %vm106, %v137, 0
    %260 = vmatprep.subr.bf16.mxu0 0
    %261 = vmatpush1.bf16.msra.mxu0 0
    %262 = vmatprep.subr.bf16.mxu0 0
    %263 = vmatpush1.bf16.msra.mxu0 0
    %264 = vmatprep.subr.bf16.mxu0 0
    %265 = vmatpush1.bf16.msra.mxu0 0
    %266 = vmatprep.subr.bf16.mxu0 0
    %267 = vmatpush1.bf16.msra.mxu0 0
    %268 = vmatprep.subr.bf16.mxu0 0
    %269 = vmatpush1.bf16.msra.mxu0 0
    %270 = vmatprep.subr.bf16.mxu0 0
    %271 = vmatpush1.bf16.msra.mxu0 0
    %272 = vmatprep.subr.bf16.mxu0 0
    %273 = vmatpush1.bf16.msra.mxu0 0
    %274 = vmatprep.subr.bf16.mxu0 0
    %275 = vmatpush1.bf16.msra.mxu0 %v256
    %276 = vmatprep.subr.bf16.mxu0 0
    %277 = vmatpush2.bf16.msra.mxu0 0
    %278 = vmatprep.subr.bf16.mxu0 0
    %279 = vmatpush2.bf16.msra.mxu0 0
    %280 = vmatprep.subr.bf16.mxu0 0
    %281 = vmatpush2.bf16.msra.mxu0 0
    %282 = vmatprep.subr.bf16.mxu0 0
    %283 = vmatpush2.bf16.msra.mxu0 0
    %284 = vmatprep.subr.bf16.mxu0 0
    %285 = vmatpush2.bf16.msra.mxu0 0
    %286 = vmatprep.subr.bf16.mxu0 0
    %287 = vmatpush2.bf16.msra.mxu0 0
    %288 = vmatprep.subr.bf16.mxu0 0
    %289 = vmatpush2.bf16.msra.mxu0 0
    %290 = vmatprep.subr.bf16.mxu0 0
    %291 = vmatpush2.bf16.msra.mxu0 0
    %292 = vmatprep.mubr.bf16.mxu0 0
    %293 = vmatmul.mubr.bf16.gmra.mxu0 %v258
    %v294 = vpop.f32.mrf.mxu0
    %v295 = vadd.f32 0.0, %v294
    %v296 = vpop.f32.mrf.mxu0
    %v297 = vpop.f32.mrf.mxu0
    %v298 = vadd.f32 0.0, %v297
    %v299 = vpop.f32.mrf.mxu0
    %300 = vdwg.mxu0
    %v301 = vmul.f32 %v135, %v295
    %v302 = vmul.f32 %v136, %v298
    %v303 = vlaneseq
    %v304 = vshrl.u32 %v303, 7
    %v305 = vsub.s32 0, %v304
    %v306 = vrot.slane %v138, %v305
    %v307 = vadd.f32 %v301, %v306
    %v308 = vadd.f32 %v302, %v306
    %v309 = vmax.f32 %v307, 0.0
    %v310 = vmax.f32 %v308, 0.0
    %v311 = vpack.c.bf16 %v310, %v309
    %v312 = vld [vmem:[#allocation8] sm:$0xf]
    %v313 = vld [vmem:[#allocation8 + $0x4] sm:$0xf]
    %v314 = vld [vmem:[#allocation8 + $0x8] sm:$0xf]
    %v315 = vld [vmem:[#allocation8 + $0xc] sm:$0xf]
    %v316 = vld [vmem:[#allocation8 + $0x10] sm:$0xf]
    %v317 = vld [vmem:[#allocation8 + $0x14] sm:$0xf]
    %v318 = vld [vmem:[#allocation8 + $0x18] sm:$0xf]
    %v319 = vld [vmem:[#allocation8 + $0x1c] sm:$0xf]
    %v320 = vld [vmem:[#allocation8 + $0x20] sm:$0xf]
    %v321 = vld [vmem:[#allocation8 + $0x24] sm:$0xf]
    %v322 = vld [vmem:[#allocation8 + $0x28] sm:$0xf]
    %v323 = vld [vmem:[#allocation8 + $0x2c] sm:$0xf]
    %v324 = vld [vmem:[#allocation8 + $0x30] sm:$0xf]
    %v325 = vld [vmem:[#allocation8 + $0x34] sm:$0xf]
    %v326 = vld [vmem:[#allocation8 + $0x38] sm:$0xf]
    %v327 = vld [vmem:[#allocation8 + $0x3c] sm:$0xf]
    %v344 = vunpack.c.l.b16 %v312
    %v345 = vunpack.c.l.b16 %v313
    %v346 = vunpack.c.l.b16 %v314
    %v347 = vunpack.c.l.b16 %v315
    %v348 = vunpack.c.l.b16 %v316
    %v349 = vunpack.c.l.b16 %v317
    %v350 = vunpack.c.l.b16 %v318
    %v351 = vunpack.c.l.b16 %v319
    %v352 = vunpack.c.l.b16 %v320
    %v353 = vunpack.c.l.b16 %v321
    %v354 = vunpack.c.l.b16 %v322
    %v355 = vunpack.c.l.b16 %v323
    %v356 = vunpack.c.l.b16 %v324
    %v357 = vunpack.c.l.b16 %v325
    %v358 = vunpack.c.l.b16 %v326
    %v359 = vunpack.c.l.b16 %v327
    %v360 = vpack.c.b16 %v345, %v344
    %v361 = vpack.c.b16 %v347, %v346
    %v362 = vpack.c.b16 %v349, %v348
    %v363 = vpack.c.b16 %v351, %v350
    %v364 = vpack.c.b16 %v353, %v352
    %v365 = vpack.c.b16 %v355, %v354
    %v366 = vpack.c.b16 %v357, %v356
    %v367 = vpack.c.b16 %v359, %v358
    %376 = vmatprep.subr.bf16.mxu0 0
    %377 = vmatpush1.bf16.msra.mxu0 %v367
    %378 = vmatprep.subr.bf16.mxu0 0
    %379 = vmatpush1.bf16.msra.mxu0 %v366
    %380 = vmatprep.subr.bf16.mxu0 0
    %381 = vmatpush1.bf16.msra.mxu0 %v365
    %382 = vmatprep.subr.bf16.mxu0 0
    %383 = vmatpush1.bf16.msra.mxu0 %v364
    %384 = vmatprep.subr.bf16.mxu0 0
    %385 = vmatpush1.bf16.msra.mxu0 %v363
    %386 = vmatprep.subr.bf16.mxu0 0
    %387 = vmatpush1.bf16.msra.mxu0 %v362
    %388 = vmatprep.subr.bf16.mxu0 0
    %389 = vmatpush1.bf16.msra.mxu0 %v361
    %390 = vmatprep.subr.bf16.mxu0 0
    %391 = vmatpush1.bf16.msra.mxu0 %v360
    %392 = vmatprep.subr.bf16.mxu0 0
    %393 = vmatpush2.bf16.msra.mxu0 0
    %394 = vmatprep.subr.bf16.mxu0 0
    %395 = vmatpush2.bf16.msra.mxu0 0
    %396 = vmatprep.subr.bf16.mxu0 0
    %397 = vmatpush2.bf16.msra.mxu0 0
    %398 = vmatprep.subr.bf16.mxu0 0
    %399 = vmatpush2.bf16.msra.mxu0 0
    %400 = vmatprep.subr.bf16.mxu0 0
    %401 = vmatpush2.bf16.msra.mxu0 0
    %402 = vmatprep.subr.bf16.mxu0 0
    %403 = vmatpush2.bf16.msra.mxu0 0
    %404 = vmatprep.subr.bf16.mxu0 0
    %405 = vmatpush2.bf16.msra.mxu0 0
    %406 = vmatprep.subr.bf16.mxu0 0
    %407 = vmatpush2.bf16.msra.mxu0 0
    %408 = vmatprep.mubr.bf16.mxu0 0
    %409 = vmatmul.mubr.bf16.gmra.mxu0 %v311
    %v410 = vpop.f32.mrf.mxu0
    %v411 = vadd.f32 0.0, %v410
    %v412 = vpop.f32.mrf.mxu0
    %v413 = vpop.f32.mrf.mxu0
    %v414 = vadd.f32 0.0, %v413
    %v415 = vpop.f32.mrf.mxu0
    %416 = vdwg.mxu0
    %v417 = vmul.f32 %v135, %v411
    %v418 = vmul.f32 %v136, %v414
    %v419 = vpack.c.bf16 %v418, %v417
    %420 = vmatprep.subr.bf16.mxu0 0
    %421 = vmatpush1.bf16.msra.mxu0 0
    %422 = vmatprep.subr.bf16.mxu0 0
    %423 = vmatpush1.bf16.msra.mxu0 0
    %424 = vmatprep.subr.bf16.mxu0 0
    %425 = vmatpush1.bf16.msra.mxu0 0
    %426 = vmatprep.subr.bf16.mxu0 0
    %427 = vmatpush1.bf16.msra.mxu0 0
    %428 = vmatprep.subr.bf16.mxu0 0
    %429 = vmatpush1.bf16.msra.mxu0 0
    %430 = vmatprep.subr.bf16.mxu0 0
    %431 = vmatpush1.bf16.msra.mxu0 0
    %432 = vmatprep.subr.bf16.mxu0 0
    %433 = vmatpush1.bf16.msra.mxu0 0
    %434 = vmatprep.subr.bf16.mxu0 0
    %435 = vmatpush1.bf16.msra.mxu0 %v419
    %436 = vmatprep.subr.bf16.mxu0 0
    %437 = vmatpush2.bf16.msra.mxu0 0
    %438 = vmatprep.subr.bf16.mxu0 0
    %439 = vmatpush2.bf16.msra.mxu0 0
    %440 = vmatprep.subr.bf16.mxu0 0
    %441 = vmatpush2.bf16.msra.mxu0 0
    %442 = vmatprep.subr.bf16.mxu0 0
    %443 = vmatpush2.bf16.msra.mxu0 0
    %444 = vmatprep.subr.bf16.mxu0 0
    %445 = vmatpush2.bf16.msra.mxu0 0
    %446 = vmatprep.subr.bf16.mxu0 0
    %447 = vmatpush2.bf16.msra.mxu0 0
    %448 = vmatprep.subr.bf16.mxu0 0
    %449 = vmatpush2.bf16.msra.mxu0 0
    %450 = vmatprep.subr.bf16.mxu0 0
    %451 = vmatpush2.bf16.msra.mxu0 0
    %452 = vmatprep.mubr.bf16.mxu0 0
    %453 = vmatmul.mubr.bf16.gmra.mxu0 %v258
    %v454 = vpop.f32.mrf.mxu0
    %v455 = vadd.f32 0.0, %v454
    %v456 = vpop.f32.mrf.mxu0
    %v457 = vpop.f32.mrf.mxu0
    %v458 = vadd.f32 0.0, %v457
    %v459 = vpop.f32.mrf.mxu0
    %460 = vdwg.mxu0
    %v461 = vmul.f32 %v135, %v455
    %v462 = vmul.f32 %v136, %v458
    %v463 = vlaneseq
    %v464 = vshrl.u32 %v463, 7
    %v465 = vsub.s32 0, %v464
    %v466 = vrot.slane %v139, %v465
    %v467 = vadd.f32 %v461, %v466
    %v468 = vadd.f32 %v462, %v466
    %v469 = vmax.f32 %v467, 0.0
    %v470 = vmax.f32 %v468, 0.0
    %v471 = vlaneseq
    %v472 = vshrl.u32 %v471, 7
    %v473 = vsub.s32 0, %v472
    %v474 = vrot.slane %v140, %v473
    %v475 = vmul.f32 %v469, %v474
    %v476 = vmul.f32 %v470, %v474
    %477 = vadd.xlane.f32.xlu0 %v475
    %v478 = vpop.xlane.xlu0 %477
    %479 = vadd.xlane.f32.xlu0 %v476
    %v480 = vpop.xlane.xlu0 %479
    %v481 = vmul.f32 %v135, %v478
    %v482 = vmul.f32 %v136, %v480
    %v483 = vpack.c.bf16 %v482, %v481
    %484 = vmatprep.subr.bf16.mxu0 0
    %485 = vmatpush1.bf16.msra.mxu0 0
    %486 = vmatprep.subr.bf16.mxu0 0
    %487 = vmatpush1.bf16.msra.mxu0 0
    %488 = vmatprep.subr.bf16.mxu0 0
    %489 = vmatpush1.bf16.msra.mxu0 0
    %490 = vmatprep.subr.bf16.mxu0 0
    %491 = vmatpush1.bf16.msra.mxu0 0
    %492 = vmatprep.subr.bf16.mxu0 0
    %493 = vmatpush1.bf16.msra.mxu0 0
    %494 = vmatprep.subr.bf16.mxu0 0
    %495 = vmatpush1.bf16.msra.mxu0 0
    %496 = vmatprep.subr.bf16.mxu0 0
    %497 = vmatpush1.bf16.msra.mxu0 0
    %498 = vmatprep.subr.bf16.mxu0 0
    %499 = vmatpush1.bf16.msra.mxu0 %v483
    %500 = vmatprep.subr.bf16.mxu0 0
    %501 = vmatpush2.bf16.msra.mxu0 0
    %502 = vmatprep.subr.bf16.mxu0 0
    %503 = vmatpush2.bf16.msra.mxu0 0
    %504 = vmatprep.subr.bf16.mxu0 0
    %505 = vmatpush2.bf16.msra.mxu0 0
    %506 = vmatprep.subr.bf16.mxu0 0
    %507 = vmatpush2.bf16.msra.mxu0 0
    %508 = vmatprep.subr.bf16.mxu0 0
    %509 = vmatpush2.bf16.msra.mxu0 0
    %510 = vmatprep.subr.bf16.mxu0 0
    %511 = vmatpush2.bf16.msra.mxu0 0
    %512 = vmatprep.subr.bf16.mxu0 0
    %513 = vmatpush2.bf16.msra.mxu0 0
    %514 = vmatprep.subr.bf16.mxu0 0
    %515 = vmatpush2.bf16.msra.mxu0 0
    %516 = vmatprep.mubr.bf16.mxu0 0
    %517 = vmatmul.mubr.bf16.gmra.mxu0 %v258
    %v518 = vpop.f32.mrf.mxu0
    %v519 = vadd.f32 0.0, %v518
    %v520 = vpop.f32.mrf.mxu0
    %v521 = vpop.f32.mrf.mxu0
    %v522 = vadd.f32 0.0, %v521
    %v523 = vpop.f32.mrf.mxu0
    %524 = vdwg.mxu0
    %v525 = vmul.f32 %v135, %v519
    %v526 = vmul.f32 %v136, %v522
    %s527 = sld [smem:[#allocation10]]
    %v528 = vstv %s527
    %v529 = vadd.f32 %v525, %v528
    %v530 = vadd.f32 %v526, %v528
    %v531 = vmax.f32 %v529, 0.0
    %v532 = vmax.f32 %v530, 0.0
    %v533 = vld [vmem:[%s5] sm:$0x3]
    %s534 = sld [smem:[#allocation10 + $0x1]]
    %v535 = vstv %s534
    %v537 = vsel %vm106, %v533, 0
    %539 = vmatprep.subr.mxu0 0.0
    %540 = vmatpush1.msra.mxu0 0.0
    %541 = vmatprep.subr.mxu0 0.0
    %542 = vmatpush1.msra.mxu0 0.0
    %543 = vmatprep.subr.mxu0 0.0
    %544 = vmatpush1.msra.mxu0 0.0
    %545 = vmatprep.subr.mxu0 0.0
    %546 = vmatpush1.msra.mxu0 0.0
    %547 = vmatprep.subr.mxu0 0.0
    %548 = vmatpush1.msra.mxu0 0.0
    %549 = vmatprep.subr.mxu0 0.0
    %550 = vmatpush1.msra.mxu0 0.0
    %551 = vmatprep.subr.mxu0 0.0
    %552 = vmatpush1.msra.mxu0 0.0
    %553 = vmatprep.subr.mxu0 0.0
    %554 = vmatpush1.msra.mxu0 0.0
    %555 = vmatprep.subr.mxu0 0.0
    %556 = vmatpush1.msra.mxu0 0.0
    %557 = vmatprep.subr.mxu0 0.0
    %558 = vmatpush1.msra.mxu0 0.0
    %559 = vmatprep.subr.mxu0 0.0
    %560 = vmatpush1.msra.mxu0 0.0
    %561 = vmatprep.subr.mxu0 0.0
    %562 = vmatpush1.msra.mxu0 0.0
    %563 = vmatprep.subr.mxu0 0.0
    %564 = vmatpush1.msra.mxu0 0.0
    %565 = vmatprep.subr.mxu0 0.0
    %566 = vmatpush1.msra.mxu0 0.0
    %567 = vmatprep.subr.mxu0 0.0
    %568 = vmatpush1.msra.mxu0 %v532
    %569 = vmatprep.subr.mxu0 0.0
    %570 = vmatpush1.msra.mxu0 %v531
    %571 = vmatprep.subr.mxu0 0.0
    %572 = vmatpush2.msra.mxu0 0.0
    %573 = vmatprep.subr.mxu0 0.0
    %574 = vmatpush2.msra.mxu0 0.0
    %575 = vmatprep.subr.mxu0 0.0
    %576 = vmatpush2.msra.mxu0 0.0
    %577 = vmatprep.subr.mxu0 0.0
    %578 = vmatpush2.msra.mxu0 0.0
    %579 = vmatprep.subr.mxu0 0.0
    %580 = vmatpush2.msra.mxu0 0.0
    %581 = vmatprep.subr.mxu0 0.0
    %582 = vmatpush2.msra.mxu0 0.0
    %583 = vmatprep.subr.mxu0 0.0
    %584 = vmatpush2.msra.mxu0 0.0
    %585 = vmatprep.subr.mxu0 0.0
    %586 = vmatpush2.msra.mxu0 0.0
    %587 = vmatprep.subr.mxu0 0.0
    %588 = vmatpush2.msra.mxu0 0.0
    %589 = vmatprep.subr.mxu0 0.0
    %590 = vmatpush2.msra.mxu0 0.0
    %591 = vmatprep.subr.mxu0 0.0
    %592 = vmatpush2.msra.mxu0 0.0
    %593 = vmatprep.subr.mxu0 0.0
    %594 = vmatpush2.msra.mxu0 0.0
    %595 = vmatprep.subr.mxu0 0.0
    %596 = vmatpush2.msra.mxu0 0.0
    %597 = vmatprep.subr.mxu0 0.0
    %598 = vmatpush2.msra.mxu0 0.0
    %599 = vmatprep.subr.mxu0 0.0
    %600 = vmatpush2.msra.mxu0 0.0
    %601 = vmatprep.subr.mxu0 0.0
    %602 = vmatpush2.msra.mxu0 0.0
    %603 = vmatprep.mubr.f32.mxu0 0.0
    %604 = vmatmul.mubr.f32.gmra.mxu0 %v537
    %v605 = vpop.f32.mrf.mxu0
    %v606 = vadd.f32 %v535, %v605
    %v607 = vpop.f32.mrf.mxu0
    %608 = vdwg.mxu0
    %vm609 = vcmask 1024
    %610 = vst.msk [vmem:[%s7] sm:$0x3] %vm609, %v606
    // Predicated region
    $region50: #{tpu_custom_call.1} parent=1 // pred_check
      _
    $region51: #{tpu_custom_call.1} parent=1 // pred_check_branch
      %612 = sbr.rel (0) target = $region53
    $region52: #{tpu_custom_call.1} parent=1 // pred_region
      _
    $region53: #{tpu_custom_call.1} parent=1 // pred_fallthru
      _
    // Predicated region
    $region54: #{tpu_custom_call.1} parent=1 // pred_check
      _
    $region55: #{tpu_custom_call.1} parent=1 // pred_check_branch
      %614 = sbr.rel (0) target = $region57
    $region56: #{tpu_custom_call.1} parent=1 // pred_region
      _
    $region57: #{tpu_custom_call.1} parent=1 // pred_fallthru
      _
    %615 = vsyncpa [#allocation3], 1
    %616 = vsyncpa [#allocation6], 1
    %617 = vsyncpa [#allocation9], 1
    %618 = vsyncpa [#allocation4], 1

</llo_original>
